<compile_context>
chip_gen: v5e
topology: v5e:2x2
jax: 0.10.0
libtpu: 0.0.40
codegen_flags: <defaults>
</compile_context>

<pallas_src>
import functools

import jax
import jax.numpy as jnp
from jax.experimental import pallas as pl
from jax.experimental.pallas import tpu as pltpu

LANES = 128
SUBLANES = 8


def _round_up(a, b):
    return -(-a // b) * b


def _qfocal_kernel(pred_ref, true_ref, out_ref, *, gamma, alpha, total_n,
                   tile_rows, inner_steps, needs_mask):
    c = pl.program_id(0)   # partial-sum chunk ("parallel" axis)
    i = pl.program_id(1)   # reduction step within the chunk ("arbitrary" axis)

    # The (8,128) output block is resident across the inner axis -> it is the
    # accumulator.  Zero it at the start of each chunk.
    @pl.when(i == 0)
    def _():
        out_ref[...] = jnp.zeros_like(out_ref)

    x = pred_ref[...].astype(jnp.float32)
    y = true_ref[...].astype(jnp.float32)

    # One shared transcendental: e = exp(-|x|)
    #   BCE(x, y)  = max(x, 0) - x*y + log1p(e)
    #   sigmoid(x) = 1/(1+e)   if x >= 0
    #              = e/(1+e)   if x <  0
    e = jnp.exp(-jnp.abs(x))
    bce = jnp.maximum(x, 0.0) - x * y + jnp.log1p(e)
    inv = 1.0 / (1.0 + e)
    p = jnp.where(x >= 0.0, inv, e * inv)

    alpha_factor = y * alpha + (1.0 - y) * (1.0 - alpha)
    z = jnp.abs(y - p)
    if gamma == 1.5:                 # YOLOv5 default: z**1.5 == z*sqrt(z)
        mod = z * jnp.sqrt(z)
    elif gamma == 2.0:
        mod = z * z
    elif gamma == 1.0:
        mod = z
    elif gamma == 0.0:
        mod = jnp.ones_like(z)
    else:
        mod = z ** gamma

    loss = bce * alpha_factor * mod

    if needs_mask:
        # Zero every element whose logical flat index is >= total_n.  This
        # covers (a) the <128-element lane pad, (b) garbage rows of a partial
        # boundary tile, and (c) entire redundant (clamped) grid steps.
        # jnp.where is a select, so garbage/NaN in masked lanes cannot leak.
        base = (c * inner_steps + i) * (tile_rows * LANES)
        sub = jax.lax.broadcasted_iota(jnp.int32, loss.shape, 0)
        lane = jax.lax.broadcasted_iota(jnp.int32, loss.shape, 1)
        flat = base + sub * LANES + lane
        loss = jnp.where(flat < total_n, loss, 0.0)

    # (tile_rows, 128) -> (tile_rows//8, 8, 128); reduce the leading axis with
    # cheap VPU adds into the vreg-shaped accumulator (no per-step XLU reduce).
    out_ref[...] += loss.reshape(-1, SUBLANES, LANES).sum(axis=0)


def qfocal_loss(pred, true, gamma=1.5, alpha=0.25, reduction="mean",
                tile_rows=2048, num_chunks=2, cast_inputs_to_bf16=False):
    """QFocalLoss with a BCEWithLogitsLoss inner loss.

    pred, true: same shape (e.g. NCHW). Returns scalar float32 ('mean'/'sum').
    """
    assert pred.shape == true.shape
    if reduction not in ("mean", "sum"):
        # TODO(synk): reduction='none' (elementwise-output) variant not implemented; YOLOv5 uses 'mean'.
        raise NotImplementedError("reduction must be 'mean' or 'sum'")

    total_n = int(pred.size)
    assert total_n > 0

    if cast_inputs_to_bf16:
        # Optional HBM-traffic halving for mem-bound chips; off by default
        # because it slightly changes numerics vs. the f32 reference.
        pred = pred.astype(jnp.bfloat16)
        true = true.astype(jnp.bfloat16)

    lane_rows = -(-total_n // LANES)                       # rows of 128 lanes
    max_tr = max(SUBLANES, _round_up(int(tile_rows), SUBLANES))

    if lane_rows <= max_tr:
        # Small input: one full-extent tile; pad rows to a sublane multiple
        # (cheap, tensor is small) so there are no partial blocks at all.
        rows = _round_up(lane_rows, SUBLANES)
        tr = rows
    else:
        # Large input: no row padding (avoids a full HBM copy).  The ragged
        # last tile is a standard partial boundary block, masked in-kernel.
        rows = lane_rows
        tr = max_tr

    padded_total = rows * LANES
    pred_flat = jnp.ravel(pred)
    true_flat = jnp.ravel(true)
    if padded_total != total_n:
        # Only hit when total_n isn't lane-aligned (or for tiny inputs).
        pad = padded_total - total_n
        pred_flat = jnp.pad(pred_flat, (0, pad))
        true_flat = jnp.pad(true_flat, (0, pad))
    pred2 = pred_flat.reshape(rows, LANES)                 # free bitcast
    true2 = true_flat.reshape(rows, LANES)

    tiles = -(-rows // tr)                                 # tiles covering data
    n_chunks = max(1, min(int(num_chunks), tiles))         # "parallel" axis
    inner = -(-tiles // n_chunks)                          # steps per chunk
    coverage = n_chunks * inner                            # grid tiles (>= tiles)
    needs_mask = (coverage * tr * LANES) != total_n

    if coverage > tiles:
        # Redundant grid steps re-read the last valid tile (clamped block
        # index) and are fully zeroed by the in-kernel mask.
        last_tile = tiles - 1
        in_map = lambda c, i: (jnp.minimum(c * inner + i, last_tile), 0)
    else:
        in_map = lambda c, i: (c * inner + i, 0)

    kernel = functools.partial(
        _qfocal_kernel,
        gamma=float(gamma),
        alpha=float(alpha),
        total_n=total_n,
        tile_rows=tr,
        inner_steps=inner,
        needs_mask=needs_mask,
    )

    partials = pl.pallas_call(
        kernel,
        out_shape=jax.ShapeDtypeStruct((n_chunks, SUBLANES, LANES), jnp.float32),
        grid_spec=pltpu.PrefetchScalarGridSpec(
            num_scalar_prefetch=0,
            grid=(n_chunks, inner),
            in_specs=[
                pl.BlockSpec((tr, LANES), in_map),
                pl.BlockSpec((tr, LANES), in_map),
            ],
            # Per-chunk (8,128) partial-sum block; squeezed leading dim.
            out_specs=pl.BlockSpec((None, SUBLANES, LANES), lambda c, i: (c, 0, 0)),
        ),
        compiler_params=pltpu.CompilerParams(
            dimension_semantics=("parallel", "arbitrary"),
        ),
    )(pred2, true2)

    total = jnp.sum(partials)          # one tiny final reduce (XLA)
    if reduction == "mean":
        return total / total_n
    return total


def _qfocal_ref(pred, true, gamma=1.5, alpha=0.25):
    x = pred.astype(jnp.float32)
    y = true.astype(jnp.float32)
    bce = jnp.maximum(x, 0.0) - x * y + jnp.log1p(jnp.exp(-jnp.abs(x)))
    p = jax.nn.sigmoid(x)
    loss = bce * (y * alpha + (1 - y) * (1 - alpha)) * jnp.abs(y - p) ** gamma
    return loss.mean()


if __name__ == "__main__":
    key = jax.random.PRNGKey(0)
    k1, k2, k3, k4, k5, k6 = jax.random.split(key, 6)

    # NCHW like a YOLOv5 prediction tensor: batch=2, channels=4, spatial=16.
    pred = jax.random.normal(k1, (2, 4, 16, 16), dtype=jnp.float32)
    true = (jax.random.uniform(k2, (2, 4, 16, 16)) > 0.7).astype(jnp.float32)
    out = jax.block_until_ready(qfocal_loss(pred, true, gamma=1.5, alpha=0.25))
    ref = _qfocal_ref(pred, true, gamma=1.5, alpha=0.25)
    assert jnp.allclose(out, ref, rtol=1e-5, atol=1e-6), (out, ref)

    # Awkward (non-multiple-of-128) size exercises the lane pad + mask path.
    pred_b = jax.random.normal(k3, (3, 5, 7, 11), dtype=jnp.float32)
    true_b = (jax.random.uniform(k4, (3, 5, 7, 11)) > 0.5).astype(jnp.float32)
    out_b = jax.block_until_ready(qfocal_loss(pred_b, true_b))
    ref_b = _qfocal_ref(pred_b, true_b)
    assert jnp.allclose(out_b, ref_b, rtol=1e-5, atol=1e-6), (out_b, ref_b)

    # Tiny tile + 2 chunks: exercises the multi-tile path of the large-input
    # design at small scale (partial boundary tile, clamped overshoot steps).
    pred_c = jax.random.normal(k5, (2, 4, 16, 20), dtype=jnp.float32)
    true_c = (jax.random.uniform(k6, (2, 4, 16, 20)) > 0.6).astype(jnp.float32)
    out_c = jax.block_until_ready(
        qfocal_loss(pred_c, true_c, tile_rows=8, num_chunks=2))
    ref_c = _qfocal_ref(pred_c, true_c)
    assert jnp.allclose(out_c, ref_c, rtol=1e-5, atol=1e-6), (out_c, ref_c)

    print("KERNEL_OK")
</pallas_src>

<mosaic_0001>
module attributes {stable_mosaic.version = 11 : i64} {
  func.func @_qfocal_kernel(%arg0: i32, %arg1: i32, %arg2: memref<16x128xf32, #tpu.memory_space<vmem>>, %arg3: memref<16x128xf32, #tpu.memory_space<vmem>>, %arg4: memref<1x8x128xf32, #tpu.memory_space<vmem>>) attributes {dimension_semantics = [#tpu.dimension_semantics<parallel>, #tpu.dimension_semantics<arbitrary>], iteration_bounds = array<i64: 1, 1>, scalar_prefetch = 0 : i64, scratch_operands = 0 : i64, tpu.core_type = #tpu.core_type<tc>, window_params = [{transform_indices = @transform_0, window_bounds = array<i64: 16, 128>}, {transform_indices = @transform_1, window_bounds = array<i64: 16, 128>}, {transform_indices = @transform_2, window_bounds = array<i64: 1, 8, 128>}]} {
    %c0_i32 = arith.constant 0 : i32
    %0 = arith.cmpi eq, %arg1, %c0_i32 : i32
    %1 = arith.extui %0 : i1 to i32
    %c0_i32_0 = arith.constant 0 : i32
    %2 = arith.cmpi ne, %1, %c0_i32_0 : i32
    scf.if %2 {
      %cst_18 = arith.constant 0.000000e+00 : f32
      %44 = vector.broadcast %cst_18 : f32 to vector<8x128xf32>
      %c0_19 = arith.constant 0 : index
      %c0_20 = arith.constant 0 : index
      %c0_21 = arith.constant 0 : index
      %45 = vector.load %arg4[%c0_19, %c0_20, %c0_21] : memref<1x8x128xf32, #tpu.memory_space<vmem>>, vector<1x8x128xf32>
      %46 = vector.shape_cast %45 : vector<1x8x128xf32> to vector<8x128xf32>
      %47 = vector.shape_cast %44 : vector<8x128xf32> to vector<1x8x128xf32>
      tpu.vector_store %arg4[%c0_19, %c0_20, %c0_21], %47 {strides = array<i32>} : memref<1x8x128xf32, #tpu.memory_space<vmem>>, vector<1x8x128xf32>,
    } else {
    }
    %c0 = arith.constant 0 : index
    %c0_1 = arith.constant 0 : index
    %3 = vector.load %arg2[%c0, %c0_1] : memref<16x128xf32, #tpu.memory_space<vmem>>, vector<16x128xf32>
    %c0_2 = arith.constant 0 : index
    %c0_3 = arith.constant 0 : index
    %4 = vector.load %arg3[%c0_2, %c0_3] : memref<16x128xf32, #tpu.memory_space<vmem>>, vector<16x128xf32>
    %5 = math.absf %3 : vector<16x128xf32>
    %cst = arith.constant 0.000000e+00 : f32
    %6 = vector.broadcast %cst : f32 to vector<16x128xf32>
    %7 = arith.subf %6, %5 : vector<16x128xf32>
    %8 = math.exp %7 : vector<16x128xf32>
    %cst_4 = arith.constant 0.000000e+00 : f32
    %9 = vector.broadcast %cst_4 : f32 to vector<16x128xf32>
    %10 = arith.maximumf %3, %9 : vector<16x128xf32>
    %11 = arith.mulf %3, %4 : vector<16x128xf32>
    %12 = arith.subf %10, %11 : vector<16x128xf32>
    %13 = math.log1p %8 : vector<16x128xf32>
    %14 = arith.addf %12, %13 : vector<16x128xf32>
    %cst_5 = arith.constant 1.000000e+00 : f32
    %15 = vector.broadcast %cst_5 : f32 to vector<16x128xf32>
    %16 = arith.addf %15, %8 : vector<16x128xf32>
    %cst_6 = arith.constant 1.000000e+00 : f32
    %17 = vector.broadcast %cst_6 : f32 to vector<16x128xf32>
    %18 = arith.divf %17, %16 : vector<16x128xf32>
    %cst_7 = arith.constant 0.000000e+00 : f32
    %19 = vector.broadcast %cst_7 : f32 to vector<16x128xf32>
    %20 = arith.cmpf oge, %3, %19 : vector<16x128xf32>
    %21 = arith.mulf %8, %18 : vector<16x128xf32>
    %22 = arith.select %20, %18, %21 : vector<16x128xi1>, vector<16x128xf32>
    %cst_8 = arith.constant 2.500000e-01 : f32
    %23 = vector.broadcast %cst_8 : f32 to vector<16x128xf32>
    %24 = arith.mulf %4, %23 : vector<16x128xf32>
    %cst_9 = arith.constant 1.000000e+00 : f32
    %25 = vector.broadcast %cst_9 : f32 to vector<16x128xf32>
    %26 = arith.subf %25, %4 : vector<16x128xf32>
    %cst_10 = arith.constant 7.500000e-01 : f32
    %27 = vector.broadcast %cst_10 : f32 to vector<16x128xf32>
    %28 = arith.mulf %26, %27 : vector<16x128xf32>
    %29 = arith.addf %24, %28 : vector<16x128xf32>
    %30 = arith.subf %4, %22 : vector<16x128xf32>
    %31 = math.absf %30 : vector<16x128xf32>
    %32 = math.sqrt %31 : vector<16x128xf32>
    %33 = arith.mulf %31, %32 : vector<16x128xf32>
    %34 = arith.mulf %14, %29 : vector<16x128xf32>
    %35 = arith.mulf %34, %33 : vector<16x128xf32>
    %c0_11 = arith.constant 0 : index
    %c0_12 = arith.constant 0 : index
    %c0_13 = arith.constant 0 : index
    %36 = vector.load %arg4[%c0_11, %c0_12, %c0_13] : memref<1x8x128xf32, #tpu.memory_space<vmem>>, vector<1x8x128xf32>
    %37 = vector.shape_cast %36 : vector<1x8x128xf32> to vector<8x128xf32>
    %38 = vector.shape_cast %35 : vector<16x128xf32> to vector<2x8x128xf32>
    %cst_14 = arith.constant dense<0.000000e+00> : vector<8x128xf32>
    %39 = vector.multi_reduction <add>, %38, %cst_14 [0] : vector<2x8x128xf32> to vector<8x128xf32>
    %40 = arith.addf %37, %39 : vector<8x128xf32>
    %c0_15 = arith.constant 0 : index
    %c0_16 = arith.constant 0 : index
    %c0_17 = arith.constant 0 : index
    %41 = vector.load %arg4[%c0_15, %c0_16, %c0_17] : memref<1x8x128xf32, #tpu.memory_space<vmem>>, vector<1x8x128xf32>
    %42 = vector.shape_cast %41 : vector<1x8x128xf32> to vector<8x128xf32>
    %43 = vector.shape_cast %40 : vector<8x128xf32> to vector<1x8x128xf32>
    tpu.vector_store %arg4[%c0_15, %c0_16, %c0_17], %43 {strides = array<i32>} : memref<1x8x128xf32, #tpu.memory_space<vmem>>, vector<1x8x128xf32>,
    return
  }
  func.func @transform_0(%arg0: i32, %arg1: i32) -> (i32, i32) {
    %c1_i32 = arith.constant 1 : i32
    %0 = arith.muli %arg0, %c1_i32 : i32
    %1 = arith.addi %0, %arg1 : i32
    %c0_i32 = arith.constant 0 : i32
    %c0_i32_0 = arith.constant 0 : i32
    return %1, %c0_i32 : i32, i32
  }
  func.func @transform_1(%arg0: i32, %arg1: i32) -> (i32, i32) {
    %c1_i32 = arith.constant 1 : i32
    %0 = arith.muli %arg0, %c1_i32 : i32
    %1 = arith.addi %0, %arg1 : i32
    %c0_i32 = arith.constant 0 : i32
    %c0_i32_0 = arith.constant 0 : i32
    return %1, %c0_i32 : i32, i32
  }
  func.func @transform_2(%arg0: i32, %arg1: i32) -> (i32, i32, i32) {
    %c0_i32 = arith.constant 0 : i32
    %c0_i32_0 = arith.constant 0 : i32
    %c0_i32_1 = arith.constant 0 : i32
    return %arg0, %c0_i32, %c0_i32_0 : i32, i32, i32
  }
}

</mosaic_0001>

<llo_original>
// kernel: tpu_custom_call.1
$region0: #{tpu_custom_call.1}
  #allocation0 [shape = 'u32[]', space=smem, size = 0x4, offset = 0x4, fixed_abs, tag = 'smem constant byte address 0x4 - core index']
  #allocation1 [shape = 'u32[72,128]{1,0:T(1,128)}', space=vmem, size = 0x9000, scoped, tag = 'internal scratch']
  %s0 = inlined_call_operand.hbm [shape: f32[16,128], index: 0, kind: input, shape index: {}]
  %s1 = inlined_call_operand.hbm [shape: f32[16,128], index: 1, kind: input, shape index: {}]
  %s2 = inlined_call_operand.hbm [shape: f32[1,8,128], index: 2, kind: output, shape index: {}]
  %s3 = sld [smem:[#allocation0]]
  $region30: #{tpu_custom_call.1} parent=0
    _
  %s5 = ssub.s32 1, %s3
  %s6 = scalar_select 0, %s5, %s3
  $region1: #{tpu_custom_call.1} parent=0
    #allocation2 [shape = 'u8[8192]{0}', space=vmem, size = 0x2000, scoped, tag = 'input window, operand 0, single buffered']
    #allocation3 [shape = 's32[1]{0}', space=sflag, size = 0x4, scoped, tag = 'scoped memory for tpu_custom_call.1']
    #allocation4 [shape = 's32[1]{0}', space=sflag, size = 0x4, scoped, tag = 'scoped memory for tpu_custom_call.1']
    #allocation5 [shape = 'u8[8192]{0}', space=vmem, size = 0x2000, scoped, tag = 'input window, operand 1, single buffered']
    #allocation6 [shape = 's32[1]{0}', space=sflag, size = 0x4, scoped, tag = 'scoped memory for tpu_custom_call.1']
    #allocation7 [shape = 'u8[4096]{0}', space=vmem, size = 0x1000, scoped, tag = 'output window, operand 0, single buffered']
    %7 = vsyncpa [#allocation3], 0
    %8 = vsyncpa [#allocation6], 0
    %9 = vsyncpa [#allocation4], 0
    // Predicated region
    $region2: #{tpu_custom_call.1} parent=1 // pred_check
      _
    $region3: #{tpu_custom_call.1} parent=1 // pred_check_branch
      %11 = sbr.rel (0) target = $region5
    $region4: #{tpu_custom_call.1} parent=1 // pred_region
      %s12 = sadd.s32 0, 0
      %s13 = smul.u32 2, %s12
      %15 = vsyncadd [#allocation3], 0
      %s16 = smul.addr %s13, 8
      %s17 = scalar_lea.hbm %s0, %s16
      %s18 = sshll.u32 %s17, 4
      %s19 = int_to_ptr.hbm [resolvable:$true] %s18
      %s20 = sshll.u32 [#allocation2], 4
      %s21 = int_to_ptr.vmem [resolvable:$true] %s20
      %26 = dma.hbm_to_vmem [thread:$0]  %s19, 256, %s21, [#allocation3], 128, 128, 8
    $region5: #{tpu_custom_call.1} parent=1 // pred_fallthru
      _
    // Predicated region
    $region6: #{tpu_custom_call.1} parent=1 // pred_check
      _
    $region7: #{tpu_custom_call.1} parent=1 // pred_check_branch
      %28 = sbr.rel (0) target = $region9
    $region8: #{tpu_custom_call.1} parent=1 // pred_region
      %s29 = sadd.s32 0, 0
      %s30 = smul.u32 2, %s29
      %32 = vsyncadd [#allocation6], 0
      %s33 = smul.addr %s30, 8
      %s34 = scalar_lea.hbm %s1, %s33
      %s35 = sshll.u32 %s34, 4
      %s36 = int_to_ptr.hbm [resolvable:$true] %s35
      %s37 = sshll.u32 [#allocation5], 4
      %s38 = int_to_ptr.vmem [resolvable:$true] %s37
      %43 = dma.hbm_to_vmem [thread:$0]  %s36, 256, %s38, [#allocation6], 128, 128, 8
    $region9: #{tpu_custom_call.1} parent=1 // pred_fallthru
      _
    // Predicated region
    $region10: #{tpu_custom_call.1} parent=1 // pred_check
      _
    $region11: #{tpu_custom_call.1} parent=1 // pred_check_branch
      %45 = sbr.rel (0) target = $region13
    $region12: #{tpu_custom_call.1} parent=1 // pred_region
      %47 = dma.done [#allocation3], 256
    $region13: #{tpu_custom_call.1} parent=1 // pred_fallthru
      _
    // Predicated region
    $region14: #{tpu_custom_call.1} parent=1 // pred_check
      _
    $region15: #{tpu_custom_call.1} parent=1 // pred_check_branch
      %49 = sbr.rel (0) target = $region17
    $region16: #{tpu_custom_call.1} parent=1 // pred_region
      %51 = dma.done [#allocation6], 256
    $region17: #{tpu_custom_call.1} parent=1 // pred_fallthru
      _
    %s52 = sadd.s32 0, 0
    %s53 = smul.u32 2, %s52
    %s54 = sadd.s32 0, 0
    %s55 = smul.u32 2, %s54
    %p56 = scmp.eq.s32.totalorder 0, 0
    // Predicated region
    $region18: #{tpu_custom_call.1} parent=1 // pred_check
      %p57 = pneg %p56
    $region19: #{tpu_custom_call.1} parent=1 // pred_check_branch
      %59 = sbr.rel (%p57) target = $region21
    $region20: #{tpu_custom_call.1} parent=1 // pred_region
      %60 = vst [vmem:[#allocation7] sm:$0xff] 0.0
    $region21: #{tpu_custom_call.1} parent=1 // pred_fallthru
      _
    %v61 = vld [vmem:[#allocation2] sm:$0xff]
    %v62 = vld [vmem:[#allocation2 + $0x8] sm:$0xff]
    %v63 = vld [vmem:[#allocation5] sm:$0xff]
    %v64 = vld [vmem:[#allocation5 + $0x8] sm:$0xff]
    %v65 = vand.u32 2147483647, %v61
    %v66 = vand.u32 2147483647, %v62
    %v67 = vsub.f32 0.0, %v65
    %v68 = vsub.f32 0.0, %v66
    %v69 = vmul.f32 %v67, 1.442695
    %v70 = vpow.pop %v69
    %v71 = vmul.f32 %v68, 1.442695
    %v72 = vpow.pop %v71
    %v73 = vmax.f32 %v61, 0.0
    %v74 = vmax.f32 %v62, 0.0
    %v75 = vmul.f32 %v61, %v63
    %v76 = vmul.f32 %v62, %v64
    %v77 = vsub.f32 %v73, %v75
    %v78 = vsub.f32 %v74, %v76
    %v79 = vadd.f32 %v70, 1.0
    %v80 = vlog2.pop %v79
    %v81 = vmul.f32 %v80, 0.6931472
    %v82 = vmul.f32 -0.5, %v70
    %v83 = vadd.f32 %v82, 1.0
    %v84 = vmul.f32 %v83, %v70
    %v85 = vand.u32 2147483647, %v70
    %vm86 = vcmp.lt.f32.partialorder %v85, 0.0004427343
    %v87 = vsel %vm86, %v84, %v81
    %v88 = vadd.f32 %v72, 1.0
    %v89 = vlog2.pop %v88
    %v90 = vmul.f32 %v89, 0.6931472
    %v91 = vmul.f32 -0.5, %v72
    %v92 = vadd.f32 %v91, 1.0
    %v93 = vmul.f32 %v92, %v72
    %v94 = vand.u32 2147483647, %v72
    %vm95 = vcmp.lt.f32.partialorder %v94, 0.0004427343
    %v96 = vsel %vm95, %v93, %v90
    %v97 = vadd.f32 %v77, %v87
    %v98 = vadd.f32 %v78, %v96
    %v99 = vadd.f32 %v70, 1.0
    %v100 = vadd.f32 %v72, 1.0
    %v101 = vrcp.pop %v99
    %v102 = vmul.f32 %v99, %v101
    %v103 = vsub.f32 1.0, %v102
    %v104 = vmul.f32 %v101, %v103
    %v105 = vadd.f32 %v101, %v104
    %vm106 = vweird.f32 %v99
    %vm107 = vweird.f32 %v101
    %vm108 = vmor %vm106, %vm107
    %v109 = vsel %vm108, %v101, %v105
    %v110 = vand.u32 2147483647, %v99
    %vm111 = vcmp.eq.f32.partialorder %v110, 8.507059e+37
    %v112 = vand.u32 %v99, 2147483648
    %v113 = vor.u32 1.1754944e-38, %v112
    %v114 = vsel %vm111, %v113, %v109
    %v115 = vmul.f32 1.0, %v114
    %v116 = vrcp.pop %v100
    %v117 = vmul.f32 %v100, %v116
    %v118 = vsub.f32 1.0, %v117
    %v119 = vmul.f32 %v116, %v118
    %v120 = vadd.f32 %v116, %v119
    %vm121 = vweird.f32 %v100
    %vm122 = vweird.f32 %v116
    %vm123 = vmor %vm121, %vm122
    %v124 = vsel %vm123, %v116, %v120
    %v125 = vand.u32 2147483647, %v100
    %vm126 = vcmp.eq.f32.partialorder %v125, 8.507059e+37
    %v127 = vand.u32 %v100, 2147483648
    %v128 = vor.u32 1.1754944e-38, %v127
    %v129 = vsel %vm126, %v128, %v124
    %v130 = vmul.f32 1.0, %v129
    %vm131 = vcmp.ge.f32.partialorder %v61, 0.0
    %vm132 = vcmp.ge.f32.partialorder %v62, 0.0
    %v133 = vmul.f32 %v70, %v115
    %v134 = vmul.f32 %v72, %v130
    %v135 = vsel %vm131, %v115, %v133
    %v136 = vsel %vm132, %v130, %v134
    %v137 = vmul.f32 %v63, 0.25
    %v138 = vmul.f32 %v64, 0.25
    %v139 = vsub.f32 1.0, %v63
    %v140 = vsub.f32 1.0, %v64
    %v141 = vmul.f32 %v139, 0.75
    %v142 = vmul.f32 %v140, 0.75
    %v143 = vadd.f32 %v137, %v141
    %v144 = vadd.f32 %v138, %v142
    %v145 = vsub.f32 %v63, %v135
    %v146 = vsub.f32 %v64, %v136
    %v147 = vand.u32 2147483647, %v145
    %v148 = vand.u32 2147483647, %v146
    %v149 = vrsqrt.pop %v147
    %v150 = vmul.f32 %v149, %v147
    %v151 = vmul.f32 %v150, %v149
    %v152 = vmul.f32 0.5, %v151
    %v153 = vsub.f32 1.5, %v152
    %v154 = vmul.f32 %v149, %v153
    %v155 = vmul.f32 %v147, %v154
    %vm156 = vcmp.eq.f32.partialorder %v147, inf
    %v157 = vsel %vm156, %v147, %v155
    %vm158 = vcmp.eq.f32.partialorder %v147, 0.0
    %v159 = vand.u32 %v147, 2147483648
    %v160 = vsel %vm158, %v159, %v157
    %v161 = vrsqrt.pop %v148
    %v162 = vmul.f32 %v161, %v148
    %v163 = vmul.f32 %v162, %v161
    %v164 = vmul.f32 0.5, %v163
    %v165 = vsub.f32 1.5, %v164
    %v166 = vmul.f32 %v161, %v165
    %v167 = vmul.f32 %v148, %v166
    %vm168 = vcmp.eq.f32.partialorder %v148, inf
    %v169 = vsel %vm168, %v148, %v167
    %vm170 = vcmp.eq.f32.partialorder %v148, 0.0
    %v171 = vand.u32 %v148, 2147483648
    %v172 = vsel %vm170, %v171, %v169
    %v173 = vmul.f32 %v147, %v160
    %v174 = vmul.f32 %v148, %v172
    %v175 = vmul.f32 %v97, %v143
    %v176 = vmul.f32 %v98, %v144
    %v177 = vmul.f32 %v175, %v173
    %v178 = vmul.f32 %v176, %v174
    %v179 = vld [vmem:[#allocation7] sm:$0xff]
    %v180 = vadd.f32 %v177, %v178
    %v181 = vadd.f32 %v179, %v180
    %182 = vst [vmem:[#allocation7] sm:$0xff] %v181
    // Predicated region
    $region22: #{tpu_custom_call.1} parent=1 // pred_check
      _
    $region23: #{tpu_custom_call.1} parent=1 // pred_check_branch
      %184 = sbr.rel (0) target = $region25
    $region24: #{tpu_custom_call.1} parent=1 // pred_region
      %186 = vsyncadd [#allocation4], 0
      %s188 = sshll.u32 [#allocation7], 4
      %s189 = int_to_ptr.vmem [resolvable:$true] %s188
      %s190 = sshll.u32 %s2, 4
      %s191 = int_to_ptr.hbm [resolvable:$true] %s190
      %193 = dma.vmem_to_hbm [thread:$0]  %s189, 128, %s191, [#allocation4]
    $region25: #{tpu_custom_call.1} parent=1 // pred_fallthru
      _
    // Predicated region
    $region26: #{tpu_custom_call.1} parent=1 // pred_check
      _
    $region27: #{tpu_custom_call.1} parent=1 // pred_check_branch
      %195 = sbr.rel (0) target = $region29
    $region28: #{tpu_custom_call.1} parent=1 // pred_region
      %197 = dma.done [#allocation4], 128
    $region29: #{tpu_custom_call.1} parent=1 // pred_fallthru
      _
    %198 = vsyncpa [#allocation3], 1
    %199 = vsyncpa [#allocation6], 1
    %200 = vsyncpa [#allocation4], 1

</llo_original>
